<compile_context>
chip_gen: v7x
topology: tpu7x:2x2x1
jax: 0.10.0
libtpu: 0.0.40
codegen_flags: <defaults>
</compile_context>

<pallas_src>
import functools
import math

import numpy as np
import jax
import jax.numpy as jnp
from jax.experimental import pallas as pl
from jax.experimental.pallas import tpu as pltpu


# ----------------- host-side coefficient generation (mirrors __init__) -----------------
def _vm(m):
    return 0.5 if m < 0 else 0.0


def _binom(n, k):
    n = int(round(n))
    k = int(round(k))
    if k < 0 or k > n:
        return 0.0
    return float(math.comb(n, k))


def _ns_lm(l, m):
    am = abs(m)
    return (1.0 / (2.0 ** am * math.factorial(l)) *
            math.sqrt(2.0 * math.factorial(l + am) * math.factorial(l - am)
                      / (2.0 if m == 0 else 1.0)))


def _xyzcoeff_lm(l, m):
    am = abs(m)
    vmm = _vm(m)
    cs, pows = [], []
    for t in range((l - am) // 2 + 1):
        for u in range(t + 1):
            v = vmm
            v_stop = math.floor(am / 2.0 - vmm) + vmm + 1.0
            while v < v_stop:
                c = ((-1.0) ** int(round(t + v - vmm)) * (0.25 ** t) *
                     _binom(l, t) * _binom(l - t, am + t) *
                     _binom(t, u) * _binom(am, 2 * v))
                xp = int(round(2 * t + am - 2 * (u + v)))
                yp = int(round(2 * (u + v)))
                zp = int(round(l - 2 * t - am))
                cs.append(c)
                pows.append((xp, yp, zp))
                v += 1.0
    return cs, pows


def _raw_terms(max_l):
    """Raw (clm, pows, dst, ns, M) exactly as the torch module accumulates them."""
    dst, clm, pows, ns = [], [], [], []
    for l in range(max_l + 1):
        for m in range(-l, l + 1):
            ns.append(_ns_lm(l, m))
            cs, ps = _xyzcoeff_lm(l, m)
            clm += cs
            pows += ps
            dst += [l * (l + 1) + m] * len(cs)
    M = (max_l + 1) ** 2
    return clm, pows, dst, np.asarray(ns, np.float64), M


def build_rsh_tables(max_l):
    """Build kernel tables.

    Returns (sel, smat, M, T_pad, Kp):
      sel  : (3*T_pad, 3*Kp) float32 block-diagonal one-hot exponent selector
             (x block, y block, z block).
      smat : (T_pad, M) float32, scatter_add coefficients * ns_lm (term-major),
             duplicate (xp,yp,zp) monomials merged (coefficients summed) -- exact,
             since the final reduction is linear in the monomial values.
    """
    clm, pows, dst, ns, M = _raw_terms(max_l)

    uniq, order = {}, []
    for p in pows:
        if p not in uniq:
            uniq[p] = len(order)
            order.append(p)
    T = len(order)

    smat64 = np.zeros((T, M), np.float64)
    for c, d, p in zip(clm, dst, pows):
        smat64[uniq[p], d] += c * ns[d]          # scatter_add + ns_lms folded in

    T_pad = max(8, -(-T // 8) * 8)               # sublane multiple only
    Kp = max(8, -(-(max_l + 1) // 8) * 8)        # powers 0..max_l, padded to sublanes

    sel = np.zeros((3 * T_pad, 3 * Kp), np.float32)
    for t, (px, py, pz) in enumerate(order):
        sel[t, px] = 1.0
        sel[T_pad + t, Kp + py] = 1.0
        sel[2 * T_pad + t, 2 * Kp + pz] = 1.0

    smat = np.zeros((T_pad, M), np.float32)
    smat[:T, :] = smat64.astype(np.float32)
    return sel, smat, M, T_pad, Kp


# ----------------------------------- Pallas kernel -----------------------------------
def _rsh_kernel(coords_ref, sel_ref, smat_ref, out_ref, *, max_l, kp, t_pad):
    # coords: (3, tn) rows x,y,z ; sel: (3*T_pad, 3*Kp) block-diag one-hot ;
    # smat: (T_pad, M) ; out: (tn, M). Points are lane-dense inside the kernel.
    tn = coords_ref.shape[1]
    kp3 = 3 * kp

    # Combined base buffer: rows [0:Kp]=x, [Kp:2Kp]=y, [2Kp:3Kp]=z (sublane broadcasts,
    # concatenated on 8-aligned sublane boundaries).
    xb = jnp.broadcast_to(coords_ref[0:1, :], (kp, tn))
    yb = jnp.broadcast_to(coords_ref[1:2, :], (kp, tn))
    zb = jnp.broadcast_to(coords_ref[2:3, :], (kp, tn))
    base = jnp.concatenate([xb, yb, zb], axis=0)          # (3*Kp, tn)

    # Power index within each Kp block; masks hoisted and shared across x/y/z.
    ridx = jax.lax.broadcasted_iota(jnp.int32, (kp3, tn), 0)
    pidx = ridx % kp

    # Row k of each block = base^k (exact repeated multiply; row 0 == 1, matching
    # torch.pow semantics incl. 0^0 = 1 and negative bases with integer exponents).
    p = jnp.where(pidx >= 1, base, 1.0)
    for k in range(2, max_l + 1):
        p = p * jnp.where(pidx >= k, base, 1.0)

    # Fused one-hot exponent selection: ONE MXU matmul for x, y and z (exact: 0/1 rows).
    allsel = jnp.dot(sel_ref[...], p, preferred_element_type=jnp.float32)  # (3*T_pad, tn)
    poly = (allsel[0:t_pad, :]
            * allsel[t_pad:2 * t_pad, :]
            * allsel[2 * t_pad:3 * t_pad, :])              # (T_pad, tn)

    # scatter_add over terms + ns_lm scaling, contracting the term axis (dim 0 of both)
    # so the result lands directly in point-major (tn, M) layout -- no HBM transpose.
    out_ref[...] = jax.lax.dot_general(
        poly, smat_ref[...], (((0,), (0,)), ((), ())),
        preferred_element_type=jnp.float32).astype(out_ref.dtype)


def _choose_tile(N, t_pad, kp, m, tn_user):
    """Pick the point-tile size and grid step count."""
    cdiv = pl.cdiv
    # Rough live f32 words per point: base + power table (2*3*Kp), selections + poly
    # (4*T_pad), output value + double-buffered in/out blocks.
    per_pt_bytes = (2 * 3 * kp + 4 * t_pad + 3 * m + 8) * 4
    vmem_budget = 24 << 20                       # conservative; fits v7x 32 MiB scoped
    cap = max(128, (vmem_budget // per_pt_bytes) // 128 * 128)
    tn = max(128, min(tn_user, cap))
    # Keep >= 4 grid steps when N allows (>= 2 pipelined steps per TensorCore).
    tn = min(tn, max(128, cdiv(cdiv(N, 4), 128) * 128))
    steps = cdiv(N, tn)
    # Even step count so both TensorCores on megacore parts get balanced work.
    if steps > 1 and steps % 2 == 1:
        tn2 = max(128, cdiv(cdiv(N, steps + 1), 128) * 128)
        steps2 = cdiv(N, tn2)
        if steps2 % 2 == 1:
            steps2 += 1                          # one cheap padded step to balance
        tn, steps = tn2, steps2
    return tn, steps


def rsh_xyz(xyz, max_l, tables=None, tn=8192):
    """Forward pass of RSHxyz: xyz (..., 3) -> RSH (..., (max_l+1)**2)."""
    if tables is None:
        tables = build_rsh_tables(max_l)
    sel_np, smat_np, M, T_pad, Kp = tables

    in_shape = xyz.shape
    xyz2 = jnp.asarray(xyz, jnp.float32).reshape(-1, 3)
    N = xyz2.shape[0]

    tn_eff, n_steps = _choose_tile(max(N, 1), T_pad, Kp, M, tn)
    N_pad = n_steps * tn_eff

    # Lean lane-dense coordinate input: (3, N_pad) -> 12 B/point HBM read in-kernel.
    coords = jnp.pad(xyz2.T, ((0, 0), (0, N_pad - N)))

    kernel = functools.partial(_rsh_kernel, max_l=max_l, kp=Kp, t_pad=T_pad)
    out = pl.pallas_call(
        kernel,
        out_shape=jax.ShapeDtypeStruct((N_pad, M), jnp.float32),
        grid=(n_steps,),
        in_specs=[
            pl.BlockSpec((3, tn_eff), lambda i: (0, i)),            # full first dim
            pl.BlockSpec((3 * T_pad, 3 * Kp), lambda i: (0, 0)),    # constant table
            pl.BlockSpec((T_pad, M), lambda i: (0, 0)),             # constant table
        ],
        out_specs=pl.BlockSpec((tn_eff, M), lambda i: (i, 0)),      # (N_pad, M) output
        compiler_params=pltpu.CompilerParams(dimension_semantics=("parallel",)),
    )(coords, jnp.asarray(sel_np), jnp.asarray(smat_np))

    if N_pad != N:
        out = out[:N]                            # contiguous prefix slice (no transpose)
    # TODO(synk): SphericalTensor wrapper (metadata / rep_layout) not reproduced;
    # returning the raw RSH data tensor only.
    return out.reshape(*in_shape[:-1], M)


# ----------------------------- numpy reference (torch forward) -------------------------
def _reference_rsh_np(xyz_np, max_l):
    clm, pows, dst, ns, M = _raw_terms(max_l)
    xyz2 = xyz_np.reshape(-1, 3).astype(np.float64)
    out = np.zeros((xyz2.shape[0], M), np.float64)
    for c, d, (px, py, pz) in zip(clm, dst, pows):
        out[:, d] += c * (xyz2[:, 0] ** px) * (xyz2[:, 1] ** py) * (xyz2[:, 2] ** pz)
    out *= ns[None, :]
    return out.reshape(*xyz_np.shape[:-1], M)


# -------------------------------------- main ------------------------------------------
if __name__ == "__main__":
    max_l = 3
    key = jax.random.PRNGKey(0)
    xyz = jax.random.normal(key, (2, 8, 3), dtype=jnp.float32)

    tables = build_rsh_tables(max_l)
    out = jax.block_until_ready(rsh_xyz(xyz, max_l, tables=tables))

    M = (max_l + 1) ** 2
    ref = _reference_rsh_np(np.asarray(xyz, np.float64), max_l)

    assert out.shape == (2, 8, M)
    np.testing.assert_allclose(np.asarray(out, np.float64), ref, rtol=1e-4, atol=1e-4)
    print("KERNEL_OK")
</pallas_src>

<mosaic_0001>
module attributes {stable_mosaic.version = 11 : i64} {
  func.func @_rsh_kernel(%arg0: i32, %arg1: memref<3x128xf32, #tpu.memory_space<vmem>>, %arg2: memref<72x24xf32, #tpu.memory_space<vmem>>, %arg3: memref<24x16xf32, #tpu.memory_space<vmem>>, %arg4: memref<128x16xf32, #tpu.memory_space<vmem>>) attributes {dimension_semantics = [#tpu.dimension_semantics<parallel>], iteration_bounds = array<i64: 1>, scalar_prefetch = 0 : i64, scratch_operands = 0 : i64, tpu.core_type = #tpu.core_type<tc>, window_params = [{transform_indices = @transform_0, window_bounds = array<i64: 3, 128>}, {pipeline_mode = #tpu.pipeline_mode<synchronous>, transform_indices = @transform_1, window_bounds = array<i64: 72, 24>}, {pipeline_mode = #tpu.pipeline_mode<synchronous>, transform_indices = @transform_2, window_bounds = array<i64: 24, 16>}, {transform_indices = @transform_3, window_bounds = array<i64: 128, 16>}]} {
    %c0 = arith.constant 0 : index
    %c0_0 = arith.constant 0 : index
    %0 = vector.load %arg1[%c0, %c0_0] : memref<3x128xf32, #tpu.memory_space<vmem>>, vector<1x128xf32>
    %1 = vector.shape_cast %0 : vector<1x128xf32> to vector<1x128xf32>
    %2 = vector.broadcast %1 : vector<1x128xf32> to vector<8x128xf32>
    %c1 = arith.constant 1 : index
    %c0_1 = arith.constant 0 : index
    %3 = vector.load %arg1[%c1, %c0_1] : memref<3x128xf32, #tpu.memory_space<vmem>>, vector<1x128xf32>
    %4 = vector.shape_cast %3 : vector<1x128xf32> to vector<1x128xf32>
    %5 = vector.broadcast %4 : vector<1x128xf32> to vector<8x128xf32>
    %c2 = arith.constant 2 : index
    %c0_2 = arith.constant 0 : index
    %6 = vector.load %arg1[%c2, %c0_2] : memref<3x128xf32, #tpu.memory_space<vmem>>, vector<1x128xf32>
    %7 = vector.shape_cast %6 : vector<1x128xf32> to vector<1x128xf32>
    %8 = vector.broadcast %7 : vector<1x128xf32> to vector<8x128xf32>
    %9 = tpu.concatenate %2, %5, %8 in 0 : vector<8x128xf32>, vector<8x128xf32>, vector<8x128xf32> -> vector<24x128xf32>
    %10 = tpu.iota {dimensions = array<i32: 0>} : vector<24x128xi32>
    %c8_i32 = arith.constant 8 : i32
    %c0_i32 = arith.constant 0 : i32
    %11 = arith.cmpi eq, %c8_i32, %c0_i32 : i32
    %c1_i32 = arith.constant 1 : i32
    %12 = arith.select %11, %c1_i32, %c8_i32 : i32
    %13 = vector.broadcast %12 : i32 to vector<24x128xi32>
    %14 = arith.remsi %10, %13 : vector<24x128xi32>
    %c0_i32_3 = arith.constant 0 : i32
    %15 = vector.broadcast %c0_i32_3 : i32 to vector<24x128xi32>
    %16 = arith.cmpi ne, %14, %15 : vector<24x128xi32>
    %c0_i32_4 = arith.constant 0 : i32
    %17 = vector.broadcast %c0_i32_4 : i32 to vector<24x128xi32>
    %18 = arith.cmpi slt, %14, %17 : vector<24x128xi32>
    %c0_i32_5 = arith.constant 0 : i32
    %19 = arith.cmpi slt, %12, %c0_i32_5 : i32
    %20 = vector.broadcast %19 : i1 to vector<24x128xi1>
    %21 = vector.broadcast %20 : vector<24x128xi1> to vector<24x128xi1>
    %22 = arith.xori %18, %21 : vector<24x128xi1>
    %23 = arith.andi %22, %16 : vector<24x128xi1>
    %24 = vector.broadcast %12 : i32 to vector<24x128xi32>
    %25 = arith.addi %14, %24 : vector<24x128xi32>
    %26 = arith.select %23, %25, %14 : vector<24x128xi1>, vector<24x128xi32>
    %c1_i32_6 = arith.constant 1 : i32
    %27 = vector.broadcast %c1_i32_6 : i32 to vector<24x128xi32>
    %28 = arith.cmpi sge, %26, %27 : vector<24x128xi32>
    %cst = arith.constant 1.000000e+00 : f32
    %29 = vector.broadcast %cst : f32 to vector<24x128xf32>
    %30 = arith.select %28, %9, %29 : vector<24x128xi1>, vector<24x128xf32>
    %c2_i32 = arith.constant 2 : i32
    %31 = vector.broadcast %c2_i32 : i32 to vector<24x128xi32>
    %32 = arith.cmpi sge, %26, %31 : vector<24x128xi32>
    %cst_7 = arith.constant 1.000000e+00 : f32
    %33 = vector.broadcast %cst_7 : f32 to vector<24x128xf32>
    %34 = arith.select %32, %9, %33 : vector<24x128xi1>, vector<24x128xf32>
    %35 = arith.mulf %30, %34 : vector<24x128xf32>
    %c3_i32 = arith.constant 3 : i32
    %36 = vector.broadcast %c3_i32 : i32 to vector<24x128xi32>
    %37 = arith.cmpi sge, %26, %36 : vector<24x128xi32>
    %cst_8 = arith.constant 1.000000e+00 : f32
    %38 = vector.broadcast %cst_8 : f32 to vector<24x128xf32>
    %39 = arith.select %37, %9, %38 : vector<24x128xi1>, vector<24x128xf32>
    %40 = arith.mulf %35, %39 : vector<24x128xf32>
    %c0_9 = arith.constant 0 : index
    %c0_10 = arith.constant 0 : index
    %41 = vector.load %arg2[%c0_9, %c0_10] : memref<72x24xf32, #tpu.memory_space<vmem>>, vector<72x24xf32>
    %cst_11 = arith.constant dense<0.000000e+00> : vector<72x128xf32>
    %42 = tpu.matmul %41, %40, %cst_11 {dimension_numbers = #tpu.dot_dimension_numbers<[1], [0], [0], [1], [0, 0, 1, 1], [], []>} : vector<72x24xf32>, vector<24x128xf32>, vector<72x128xf32> -> vector<72x128xf32>
    %43 = vector.extract_strided_slice %42 {offsets = [0, 0], sizes = [24, 128], strides = [1, 1]} : vector<72x128xf32> to vector<24x128xf32>
    %44 = vector.extract_strided_slice %42 {offsets = [24, 0], sizes = [24, 128], strides = [1, 1]} : vector<72x128xf32> to vector<24x128xf32>
    %45 = arith.mulf %43, %44 : vector<24x128xf32>
    %46 = vector.extract_strided_slice %42 {offsets = [48, 0], sizes = [24, 128], strides = [1, 1]} : vector<72x128xf32> to vector<24x128xf32>
    %47 = arith.mulf %45, %46 : vector<24x128xf32>
    %c0_12 = arith.constant 0 : index
    %c0_13 = arith.constant 0 : index
    %48 = vector.load %arg3[%c0_12, %c0_13] : memref<24x16xf32, #tpu.memory_space<vmem>>, vector<24x16xf32>
    %cst_14 = arith.constant dense<0.000000e+00> : vector<128x16xf32>
    %49 = tpu.matmul %47, %48, %cst_14 {dimension_numbers = #tpu.dot_dimension_numbers<[0], [0], [1], [1], [0, 1, 1, 1], [], []>} : vector<24x128xf32>, vector<24x16xf32>, vector<128x16xf32> -> vector<128x16xf32>
    %c0_15 = arith.constant 0 : index
    %c0_16 = arith.constant 0 : index
    %50 = vector.load %arg4[%c0_15, %c0_16] : memref<128x16xf32, #tpu.memory_space<vmem>>, vector<128x16xf32>
    tpu.vector_store %arg4[%c0_15, %c0_16], %49 {strides = array<i32>} : memref<128x16xf32, #tpu.memory_space<vmem>>, vector<128x16xf32>,
    return
  }
  func.func @transform_0(%arg0: i32) -> (i32, i32) {
    %c0_i32 = arith.constant 0 : i32
    %c0_i32_0 = arith.constant 0 : i32
    return %c0_i32, %arg0 : i32, i32
  }
  func.func @transform_1(%arg0: i32) -> (i32, i32) {
    %c0_i32 = arith.constant 0 : i32
    %c0_i32_0 = arith.constant 0 : i32
    %c0_i32_1 = arith.constant 0 : i32
    return %c0_i32, %c0_i32_0 : i32, i32
  }
  func.func @transform_2(%arg0: i32) -> (i32, i32) {
    %c0_i32 = arith.constant 0 : i32
    %c0_i32_0 = arith.constant 0 : i32
    %c0_i32_1 = arith.constant 0 : i32
    return %c0_i32, %c0_i32_0 : i32, i32
  }
  func.func @transform_3(%arg0: i32) -> (i32, i32) {
    %c0_i32 = arith.constant 0 : i32
    %c0_i32_0 = arith.constant 0 : i32
    return %arg0, %c0_i32 : i32, i32
  }
}

</mosaic_0001>

<llo_original>
// kernel: tpu_custom_call.1
$region0: #{tpu_custom_call.1}
  #allocation0 [shape = 'u32[]', space=smem, size = 0x4, offset = 0x4, fixed_abs, tag = 'smem constant byte address 0x4 - core index']
  #allocation1 [shape = 'u32[144,128]{1,0:T(1,128)}', space=vmem, size = 0x12000, scoped, tag = 'internal scratch']
  %s0 = inlined_call_operand.vmem [shape: f32[3,128], index: 0, kind: input, shape index: {}]
  %s1 = inlined_call_operand.vmem [shape: f32[72,24], index: 1, kind: input, shape index: {}]
  %s2 = inlined_call_operand.vmem [shape: f32[24,16], index: 2, kind: input, shape index: {}]
  %s3 = inlined_call_operand.vmem [shape: f32[128,16], index: 3, kind: output, shape index: {}]
  %s4 = sld [smem:[#allocation0]]
  $region22: #{tpu_custom_call.1} parent=0
    _
  %s6 = ssub.s32 1, %s4
  %s7 = scalar_select 0, %s6, %s4
  // Predicated region
  $region2: #{tpu_custom_call.1} parent=0 // pred_check
    _
  $region3: #{tpu_custom_call.1} parent=0 // pred_check_branch
    %9 = sbr.rel (0) target = $region5
  $region4: #{tpu_custom_call.1} parent=0 // pred_region
    _
  $region5: #{tpu_custom_call.1} parent=0 // pred_fallthru
    _
  // Predicated region
  $region6: #{tpu_custom_call.1} parent=0 // pred_check
    _
  $region7: #{tpu_custom_call.1} parent=0 // pred_check_branch
    %11 = sbr.rel (0) target = $region9
  $region8: #{tpu_custom_call.1} parent=0 // pred_region
    _
  $region9: #{tpu_custom_call.1} parent=0 // pred_fallthru
    _
  // Predicated region
  $region10: #{tpu_custom_call.1} parent=0 // pred_check
    _
  $region11: #{tpu_custom_call.1} parent=0 // pred_check_branch
    %13 = sbr.rel (0) target = $region13
  $region12: #{tpu_custom_call.1} parent=0 // pred_region
    _
  $region13: #{tpu_custom_call.1} parent=0 // pred_fallthru
    _
  %v14 = vld [vmem:[%s0] sm:$0x1]
  %v15 = vlaneseq
  %v16 = vshrl.u32 %v15, 7
  %v17 = vsub.s32 0, %v16
  %v18 = vrot.slane %v14, %v17
  %v19 = vld [vmem:[%s0 + $0x1] sm:$0x1]
  %v20 = vlaneseq
  %v21 = vshrl.u32 %v20, 7
  %v22 = vsub.s32 0, %v21
  %v23 = vrot.slane %v19, %v22
  %v24 = vld [vmem:[%s0 + $0x2] sm:$0x1]
  %v25 = vlaneseq
  %v26 = vshrl.u32 %v25, 7
  %v27 = vsub.s32 0, %v26
  %v28 = vrot.slane %v24, %v27
  %v29 = vlaneseq
  %v30 = vshrl.u32 %v29, 7
  %v31 = vadd.s32 %v30, 8
  %v32 = vadd.s32 %v30, 16
  %vm33 = vcmp.lt.s32.totalorder %v30, 0
  %v34 = vsub.s32 0, %v30
  %v35 = vsel %vm33, %v34, %v30
  %v36 = vshrl.u32 %v35, 3
  %v37 = vand.u32 %v35, 7
  %v38 = vsub.s32 0, %v37
  %v39 = vsel %vm33, %v38, %v37
  %vm40 = vcmp.lt.s32.totalorder %v31, 0
  %v41 = vsub.s32 0, %v31
  %v42 = vsel %vm40, %v41, %v31
  %v43 = vshrl.u32 %v42, 3
  %v44 = vand.u32 %v42, 7
  %v45 = vsub.s32 0, %v44
  %v46 = vsel %vm40, %v45, %v44
  %vm47 = vcmp.lt.s32.totalorder %v32, 0
  %v48 = vsub.s32 0, %v32
  %v49 = vsel %vm47, %v48, %v32
  %v50 = vshrl.u32 %v49, 3
  %v51 = vand.u32 %v49, 7
  %v52 = vsub.s32 0, %v51
  %v53 = vsel %vm47, %v52, %v51
  %vm54 = vcmp.ne.s32.totalorder %v39, 0
  %vm55 = vcmp.ne.s32.totalorder %v46, 0
  %vm56 = vcmp.ne.s32.totalorder %v53, 0
  %vm57 = vcmp.lt.s32.totalorder %v39, 0
  %vm58 = vcmp.lt.s32.totalorder %v46, 0
  %vm59 = vcmp.lt.s32.totalorder %v53, 0
  %vm60 = vmand %vm57, %vm54
  %vm61 = vmand %vm58, %vm55
  %vm62 = vmand %vm59, %vm56
  %v63 = vadd.s32 %v39, 8
  %v64 = vadd.s32 %v46, 8
  %v65 = vadd.s32 %v53, 8
  %v66 = vsel %vm60, %v63, %v39
  %v67 = vsel %vm61, %v64, %v46
  %v68 = vsel %vm62, %v65, %v53
  %vm69 = vcmp.ge.s32.totalorder %v66, 1
  %vm70 = vcmp.ge.s32.totalorder %v67, 1
  %vm71 = vcmp.ge.s32.totalorder %v68, 1
  %v72 = vsel %vm69, %v18, 1.0
  %v73 = vsel %vm70, %v23, 1.0
  %v74 = vsel %vm71, %v28, 1.0
  %vm75 = vcmp.ge.s32.totalorder %v66, 2
  %vm76 = vcmp.ge.s32.totalorder %v67, 2
  %vm77 = vcmp.ge.s32.totalorder %v68, 2
  %v78 = vsel %vm75, %v18, 1.0
  %v79 = vsel %vm76, %v23, 1.0
  %v80 = vsel %vm77, %v28, 1.0
  %v81 = vmul.f32 %v72, %v78
  %v82 = vmul.f32 %v73, %v79
  %v83 = vmul.f32 %v74, %v80
  %vm84 = vcmp.ge.s32.totalorder %v66, 3
  %vm85 = vcmp.ge.s32.totalorder %v67, 3
  %vm86 = vcmp.ge.s32.totalorder %v68, 3
  %v87 = vsel %vm84, %v18, 1.0
  %v88 = vsel %vm85, %v23, 1.0
  %v89 = vsel %vm86, %v28, 1.0
  %v90 = vmul.f32 %v81, %v87
  %v91 = vmul.f32 %v82, %v88
  %v92 = vmul.f32 %v83, %v89
  %v93 = vld [vmem:[%s1] sm:$0xff]
  %v94 = vld [vmem:[%s1 + $0x8] sm:$0xff]
  %v95 = vld [vmem:[%s1 + $0x10] sm:$0xff]
  %v96 = vld [vmem:[%s1 + $0x18] sm:$0xff]
  %v97 = vld [vmem:[%s1 + $0x20] sm:$0xff]
  %v98 = vld [vmem:[%s1 + $0x28] sm:$0xff]
  %v99 = vld [vmem:[%s1 + $0x30] sm:$0xff]
  %v100 = vld [vmem:[%s1 + $0x38] sm:$0xff]
  %v101 = vld [vmem:[%s1 + $0x40] sm:$0xff]
  %vm102 = vcmask 195584
  %v104 = vsel %vm102, %v93, 0
  %v107 = vsel %vm102, %v94, 0
  %v110 = vsel %vm102, %v95, 0
  %v113 = vsel %vm102, %v96, 0
  %v116 = vsel %vm102, %v97, 0
  %v119 = vsel %vm102, %v98, 0
  %v122 = vsel %vm102, %v99, 0
  %v125 = vsel %vm102, %v100, 0
  %v128 = vsel %vm102, %v101, 0
  %130 = vmatprep.subr.mxu0 0.0
  %131 = vmatpush1.msra.mxu0 %v90
  %132 = vmatprep.subr.mxu0 0.0
  %133 = vmatpush1.msra.mxu0 %v91
  %134 = vmatprep.subr.mxu0 0.0
  %135 = vmatpush1.msra.mxu0 %v92
  %136 = vmatprep.subr.mxu0 0.0
  %137 = vmatpush1.msra.mxu0 0.0
  %138 = vmatprep.subr.mxu0 0.0
  %139 = vmatpush1.msra.mxu0 0.0
  %140 = vmatprep.subr.mxu0 0.0
  %141 = vmatpush1.msra.mxu0 0.0
  %142 = vmatprep.subr.mxu0 0.0
  %143 = vmatpush1.msra.mxu0 0.0
  %144 = vmatprep.subr.mxu0 0.0
  %145 = vmatpush1.msra.mxu0 0.0
  %146 = vmatprep.subr.mxu0 0.0
  %147 = vmatpush1.msra.mxu0 0.0
  %148 = vmatprep.subr.mxu0 0.0
  %149 = vmatpush1.msra.mxu0 0.0
  %150 = vmatprep.subr.mxu0 0.0
  %151 = vmatpush1.msra.mxu0 0.0
  %152 = vmatprep.subr.mxu0 0.0
  %153 = vmatpush1.msra.mxu0 0.0
  %154 = vmatprep.subr.mxu0 0.0
  %155 = vmatpush1.msra.mxu0 0.0
  %156 = vmatprep.subr.mxu0 0.0
  %157 = vmatpush1.msra.mxu0 0.0
  %158 = vmatprep.subr.mxu0 0.0
  %159 = vmatpush1.msra.mxu0 0.0
  %160 = vmatprep.subr.mxu0 0.0
  %161 = vmatpush1.msra.mxu0 0.0
  %162 = vmatprep.subr.mxu0 0.0
  %163 = vmatpush1.msra.mxu0 0.0
  %164 = vmatprep.subr.mxu0 0.0
  %165 = vmatpush1.msra.mxu0 0.0
  %166 = vmatprep.subr.mxu0 0.0
  %167 = vmatpush1.msra.mxu0 0.0
  %168 = vmatprep.subr.mxu0 0.0
  %169 = vmatpush1.msra.mxu0 0.0
  %170 = vmatprep.subr.mxu0 0.0
  %171 = vmatpush1.msra.mxu0 0.0
  %172 = vmatprep.subr.mxu0 0.0
  %173 = vmatpush1.msra.mxu0 0.0
  %174 = vmatprep.subr.mxu0 0.0
  %175 = vmatpush1.msra.mxu0 0.0
  %176 = vmatprep.subr.mxu0 0.0
  %177 = vmatpush1.msra.mxu0 0.0
  %178 = vmatprep.subr.mxu0 0.0
  %179 = vmatpush1.msra.mxu0 0.0
  %180 = vmatprep.subr.mxu0 0.0
  %181 = vmatpush1.msra.mxu0 0.0
  %182 = vmatprep.subr.mxu0 0.0
  %183 = vmatpush1.msra.mxu0 0.0
  %184 = vmatprep.subr.mxu0 0.0
  %185 = vmatpush1.msra.mxu0 0.0
  %186 = vmatprep.subr.mxu0 0.0
  %187 = vmatpush1.msra.mxu0 0.0
  %188 = vmatprep.subr.mxu0 0.0
  %189 = vmatpush1.msra.mxu0 0.0
  %190 = vmatprep.subr.mxu0 0.0
  %191 = vmatpush1.msra.mxu0 0.0
  %192 = vmatprep.subr.mxu0 0.0
  %193 = vmatpush1.msra.mxu0 0.0
  %194 = vmatprep.mubr.f32.mxu0 0.0
  %195 = vmatmul.mubr.f32.gmra.mrb[0].mxu0 %v104
  %v196 = vpop.f32.mrb[0].mxu0
  %v197 = vadd.f32 0.0, %v196
  %v198 = vpop.f32.mrb[0].mxu0
  %199 = vmatprep.mubr.f32.mxu0 0.0
  %200 = vmatmul.mubr.f32.gmra.mrb[0].mxu0 %v107
  %v201 = vpop.f32.mrb[0].mxu0
  %v202 = vadd.f32 0.0, %v201
  %v203 = vpop.f32.mrb[0].mxu0
  %204 = vmatprep.mubr.f32.mxu0 0.0
  %205 = vmatmul.mubr.f32.gmra.mrb[0].mxu0 %v110
  %v206 = vpop.f32.mrb[0].mxu0
  %v207 = vadd.f32 0.0, %v206
  %v208 = vpop.f32.mrb[0].mxu0
  %209 = vmatprep.mubr.f32.mxu0 0.0
  %210 = vmatmul.mubr.f32.gmra.mrb[0].mxu0 %v113
  %v211 = vpop.f32.mrb[0].mxu0
  %v212 = vadd.f32 0.0, %v211
  %v213 = vpop.f32.mrb[0].mxu0
  %214 = vmatprep.mubr.f32.mxu0 0.0
  %215 = vmatmul.mubr.f32.gmra.mrb[0].mxu0 %v116
  %v216 = vpop.f32.mrb[0].mxu0
  %v217 = vadd.f32 0.0, %v216
  %v218 = vpop.f32.mrb[0].mxu0
  %219 = vmatprep.mubr.f32.mxu0 0.0
  %220 = vmatmul.mubr.f32.gmra.mrb[0].mxu0 %v119
  %v221 = vpop.f32.mrb[0].mxu0
  %v222 = vadd.f32 0.0, %v221
  %v223 = vpop.f32.mrb[0].mxu0
  %224 = vmatprep.mubr.f32.mxu0 0.0
  %225 = vmatmul.mubr.f32.gmra.mrb[0].mxu0 %v122
  %v226 = vpop.f32.mrb[0].mxu0
  %v227 = vadd.f32 0.0, %v226
  %v228 = vpop.f32.mrb[0].mxu0
  %229 = vmatprep.mubr.f32.mxu0 0.0
  %230 = vmatmul.mubr.f32.gmra.mrb[0].mxu0 %v125
  %v231 = vpop.f32.mrb[0].mxu0
  %v232 = vadd.f32 0.0, %v231
  %v233 = vpop.f32.mrb[0].mxu0
  %234 = vmatprep.mubr.f32.mxu0 0.0
  %235 = vmatmul.mubr.f32.gmra.mrb[0].mxu0 %v128
  %v236 = vpop.f32.mrb[0].mxu0
  %v237 = vadd.f32 0.0, %v236
  %v238 = vpop.f32.mrb[0].mxu0
  %239 = vdwg.mxu0
  %v240 = vmul.f32 %v197, %v212
  %v241 = vmul.f32 %v202, %v217
  %v242 = vmul.f32 %v207, %v222
  %v243 = vmul.f32 %v240, %v227
  %v244 = vmul.f32 %v241, %v232
  %v245 = vmul.f32 %v242, %v237
  %v246 = vld [vmem:[%s2] sm:$0xff]
  %v247 = vld [vmem:[%s2 + $0x8] sm:$0xff]
  %v248 = vld [vmem:[%s2 + $0x10] sm:$0xff]
  %249 = vxpose.xlu0.b32.start [1/16] %v243, 128
  %250 = vxpose.xlu0.b32.cont [2/16] %v244, 128
  %251 = vxpose.xlu0.b32.cont [3/16] %v245, 128
  %252 = vxpose.xlu0.b32.cont [4/16] 0.0, 128
  %253 = vxpose.xlu0.b32.cont [5/16] 0.0, 128
  %254 = vxpose.xlu0.b32.cont [6/16] 0.0, 128
  %255 = vxpose.xlu0.b32.cont [7/16] 0.0, 128
  %256 = vxpose.xlu0.b32.cont [8/16] 0.0, 128
  %257 = vxpose.xlu0.b32.cont [9/16] 0.0, 128
  %258 = vxpose.xlu0.b32.cont [10/16] 0.0, 128
  %259 = vxpose.xlu0.b32.cont [11/16] 0.0, 128
  %260 = vxpose.xlu0.b32.cont [12/16] 0.0, 128
  %261 = vxpose.xlu0.b32.cont [13/16] 0.0, 128
  %262 = vxpose.xlu0.b32.cont [14/16] 0.0, 128
  %263 = vxpose.xlu0.b32.cont [15/16] 0.0, 128
  %264 = vxpose.xlu0.b32.end [16/16] 0.0, 128
  %v265 = vpop.trf.xlu0
  %v266 = vpop.trf.xlu0
  %v267 = vpop.trf.xlu0
  %v268 = vpop.trf.xlu0
  %v269 = vpop.trf.xlu0
  %v270 = vpop.trf.xlu0
  %v271 = vpop.trf.xlu0
  %v272 = vpop.trf.xlu0
  %v273 = vpop.trf.xlu0
  %v274 = vpop.trf.xlu0
  %v275 = vpop.trf.xlu0
  %v276 = vpop.trf.xlu0
  %v277 = vpop.trf.xlu0
  %v278 = vpop.trf.xlu0
  %v279 = vpop.trf.xlu0
  %v280 = vpop.trf.xlu0
  %v282 = vsel %vm102, %v265, 0
  %v285 = vsel %vm102, %v266, 0
  %v288 = vsel %vm102, %v267, 0
  %v291 = vsel %vm102, %v268, 0
  %v294 = vsel %vm102, %v269, 0
  %v297 = vsel %vm102, %v270, 0
  %v300 = vsel %vm102, %v271, 0
  %v303 = vsel %vm102, %v272, 0
  %v306 = vsel %vm102, %v273, 0
  %v309 = vsel %vm102, %v274, 0
  %v312 = vsel %vm102, %v275, 0
  %v315 = vsel %vm102, %v276, 0
  %v318 = vsel %vm102, %v277, 0
  %v321 = vsel %vm102, %v278, 0
  %v324 = vsel %vm102, %v279, 0
  %v327 = vsel %vm102, %v280, 0
  %329 = vmatprep.subr.mxu0 0.0
  %330 = vmatpush1.msra.mxu0 %v246
  %331 = vmatprep.subr.mxu0 0.0
  %332 = vmatpush1.msra.mxu0 %v247
  %333 = vmatprep.subr.mxu0 0.0
  %334 = vmatpush1.msra.mxu0 %v248
  %335 = vmatprep.subr.mxu0 0.0
  %336 = vmatpush1.msra.mxu0 0.0
  %337 = vmatprep.subr.mxu0 0.0
  %338 = vmatpush1.msra.mxu0 0.0
  %339 = vmatprep.subr.mxu0 0.0
  %340 = vmatpush1.msra.mxu0 0.0
  %341 = vmatprep.subr.mxu0 0.0
  %342 = vmatpush1.msra.mxu0 0.0
  %343 = vmatprep.subr.mxu0 0.0
  %344 = vmatpush1.msra.mxu0 0.0
  %345 = vmatprep.subr.mxu0 0.0
  %346 = vmatpush1.msra.mxu0 0.0
  %347 = vmatprep.subr.mxu0 0.0
  %348 = vmatpush1.msra.mxu0 0.0
  %349 = vmatprep.subr.mxu0 0.0
  %350 = vmatpush1.msra.mxu0 0.0
  %351 = vmatprep.subr.mxu0 0.0
  %352 = vmatpush1.msra.mxu0 0.0
  %353 = vmatprep.subr.mxu0 0.0
  %354 = vmatpush1.msra.mxu0 0.0
  %355 = vmatprep.subr.mxu0 0.0
  %356 = vmatpush1.msra.mxu0 0.0
  %357 = vmatprep.subr.mxu0 0.0
  %358 = vmatpush1.msra.mxu0 0.0
  %359 = vmatprep.subr.mxu0 0.0
  %360 = vmatpush1.msra.mxu0 0.0
  %361 = vmatprep.subr.mxu0 0.0
  %362 = vmatpush1.msra.mxu0 0.0
  %363 = vmatprep.subr.mxu0 0.0
  %364 = vmatpush1.msra.mxu0 0.0
  %365 = vmatprep.subr.mxu0 0.0
  %366 = vmatpush1.msra.mxu0 0.0
  %367 = vmatprep.subr.mxu0 0.0
  %368 = vmatpush1.msra.mxu0 0.0
  %369 = vmatprep.subr.mxu0 0.0
  %370 = vmatpush1.msra.mxu0 0.0
  %371 = vmatprep.subr.mxu0 0.0
  %372 = vmatpush1.msra.mxu0 0.0
  %373 = vmatprep.subr.mxu0 0.0
  %374 = vmatpush1.msra.mxu0 0.0
  %375 = vmatprep.subr.mxu0 0.0
  %376 = vmatpush1.msra.mxu0 0.0
  %377 = vmatprep.subr.mxu0 0.0
  %378 = vmatpush1.msra.mxu0 0.0
  %379 = vmatprep.subr.mxu0 0.0
  %380 = vmatpush1.msra.mxu0 0.0
  %381 = vmatprep.subr.mxu0 0.0
  %382 = vmatpush1.msra.mxu0 0.0
  %383 = vmatprep.subr.mxu0 0.0
  %384 = vmatpush1.msra.mxu0 0.0
  %385 = vmatprep.subr.mxu0 0.0
  %386 = vmatpush1.msra.mxu0 0.0
  %387 = vmatprep.subr.mxu0 0.0
  %388 = vmatpush1.msra.mxu0 0.0
  %389 = vmatprep.subr.mxu0 0.0
  %390 = vmatpush1.msra.mxu0 0.0
  %391 = vmatprep.subr.mxu0 0.0
  %392 = vmatpush1.msra.mxu0 0.0
  %393 = vmatprep.mubr.f32.mxu0 0.0
  %394 = vmatmul.mubr.f32.gmra.mrb[0].mxu0 %v282
  %v395 = vpop.f32.mrb[0].mxu0
  %v396 = vadd.f32 0.0, %v395
  %v397 = vpop.f32.mrb[0].mxu0
  %398 = vmatprep.mubr.f32.mxu0 0.0
  %399 = vmatmul.mubr.f32.gmra.mrb[0].mxu0 %v285
  %v400 = vpop.f32.mrb[0].mxu0
  %v401 = vadd.f32 0.0, %v400
  %v402 = vpop.f32.mrb[0].mxu0
  %403 = vmatprep.mubr.f32.mxu0 0.0
  %404 = vmatmul.mubr.f32.gmra.mrb[0].mxu0 %v288
  %v405 = vpop.f32.mrb[0].mxu0
  %v406 = vadd.f32 0.0, %v405
  %v407 = vpop.f32.mrb[0].mxu0
  %408 = vmatprep.mubr.f32.mxu0 0.0
  %409 = vmatmul.mubr.f32.gmra.mrb[0].mxu0 %v291
  %v410 = vpop.f32.mrb[0].mxu0
  %v411 = vadd.f32 0.0, %v410
  %v412 = vpop.f32.mrb[0].mxu0
  %413 = vmatprep.mubr.f32.mxu0 0.0
  %414 = vmatmul.mubr.f32.gmra.mrb[0].mxu0 %v294
  %v415 = vpop.f32.mrb[0].mxu0
  %v416 = vadd.f32 0.0, %v415
  %v417 = vpop.f32.mrb[0].mxu0
  %418 = vmatprep.mubr.f32.mxu0 0.0
  %419 = vmatmul.mubr.f32.gmra.mrb[0].mxu0 %v297
  %v420 = vpop.f32.mrb[0].mxu0
  %v421 = vadd.f32 0.0, %v420
  %v422 = vpop.f32.mrb[0].mxu0
  %423 = vmatprep.mubr.f32.mxu0 0.0
  %424 = vmatmul.mubr.f32.gmra.mrb[0].mxu0 %v300
  %v425 = vpop.f32.mrb[0].mxu0
  %v426 = vadd.f32 0.0, %v425
  %v427 = vpop.f32.mrb[0].mxu0
  %428 = vmatprep.mubr.f32.mxu0 0.0
  %429 = vmatmul.mubr.f32.gmra.mrb[0].mxu0 %v303
  %v430 = vpop.f32.mrb[0].mxu0
  %v431 = vadd.f32 0.0, %v430
  %v432 = vpop.f32.mrb[0].mxu0
  %433 = vmatprep.mubr.f32.mxu0 0.0
  %434 = vmatmul.mubr.f32.gmra.mrb[0].mxu0 %v306
  %v435 = vpop.f32.mrb[0].mxu0
  %v436 = vadd.f32 0.0, %v435
  %v437 = vpop.f32.mrb[0].mxu0
  %438 = vmatprep.mubr.f32.mxu0 0.0
  %439 = vmatmul.mubr.f32.gmra.mrb[0].mxu0 %v309
  %v440 = vpop.f32.mrb[0].mxu0
  %v441 = vadd.f32 0.0, %v440
  %v442 = vpop.f32.mrb[0].mxu0
  %443 = vmatprep.mubr.f32.mxu0 0.0
  %444 = vmatmul.mubr.f32.gmra.mrb[0].mxu0 %v312
  %v445 = vpop.f32.mrb[0].mxu0
  %v446 = vadd.f32 0.0, %v445
  %v447 = vpop.f32.mrb[0].mxu0
  %448 = vmatprep.mubr.f32.mxu0 0.0
  %449 = vmatmul.mubr.f32.gmra.mrb[0].mxu0 %v315
  %v450 = vpop.f32.mrb[0].mxu0
  %v451 = vadd.f32 0.0, %v450
  %v452 = vpop.f32.mrb[0].mxu0
  %453 = vmatprep.mubr.f32.mxu0 0.0
  %454 = vmatmul.mubr.f32.gmra.mrb[0].mxu0 %v318
  %v455 = vpop.f32.mrb[0].mxu0
  %v456 = vadd.f32 0.0, %v455
  %v457 = vpop.f32.mrb[0].mxu0
  %458 = vmatprep.mubr.f32.mxu0 0.0
  %459 = vmatmul.mubr.f32.gmra.mrb[0].mxu0 %v321
  %v460 = vpop.f32.mrb[0].mxu0
  %v461 = vadd.f32 0.0, %v460
  %v462 = vpop.f32.mrb[0].mxu0
  %463 = vmatprep.mubr.f32.mxu0 0.0
  %464 = vmatmul.mubr.f32.gmra.mrb[0].mxu0 %v324
  %v465 = vpop.f32.mrb[0].mxu0
  %v466 = vadd.f32 0.0, %v465
  %v467 = vpop.f32.mrb[0].mxu0
  %468 = vmatprep.mubr.f32.mxu0 0.0
  %469 = vmatmul.mubr.f32.gmra.mrb[0].mxu0 %v327
  %v470 = vpop.f32.mrb[0].mxu0
  %v471 = vadd.f32 0.0, %v470
  %v472 = vpop.f32.mrb[0].mxu0
  %473 = vdwg.mxu0
  %vm474 = vcmask 130048
  %475 = vst.msk [vmem:[%s3] sm:$0xff] %vm474, %v396
  %476 = vst.msk [vmem:[%s3 + $0x8] sm:$0xff] %vm474, %v401
  %477 = vst.msk [vmem:[%s3 + $0x10] sm:$0xff] %vm474, %v406
  %478 = vst.msk [vmem:[%s3 + $0x18] sm:$0xff] %vm474, %v411
  %479 = vst.msk [vmem:[%s3 + $0x20] sm:$0xff] %vm474, %v416
  %480 = vst.msk [vmem:[%s3 + $0x28] sm:$0xff] %vm474, %v421
  %481 = vst.msk [vmem:[%s3 + $0x30] sm:$0xff] %vm474, %v426
  %482 = vst.msk [vmem:[%s3 + $0x38] sm:$0xff] %vm474, %v431
  %483 = vst.msk [vmem:[%s3 + $0x40] sm:$0xff] %vm474, %v436
  %484 = vst.msk [vmem:[%s3 + $0x48] sm:$0xff] %vm474, %v441
  %485 = vst.msk [vmem:[%s3 + $0x50] sm:$0xff] %vm474, %v446
  %486 = vst.msk [vmem:[%s3 + $0x58] sm:$0xff] %vm474, %v451
  %487 = vst.msk [vmem:[%s3 + $0x60] sm:$0xff] %vm474, %v456
  %488 = vst.msk [vmem:[%s3 + $0x68] sm:$0xff] %vm474, %v461
  %489 = vst.msk [vmem:[%s3 + $0x70] sm:$0xff] %vm474, %v466
  %490 = vst.msk [vmem:[%s3 + $0x78] sm:$0xff] %vm474, %v471
  // Predicated region
  $region14: #{tpu_custom_call.1} parent=0 // pred_check
    _
  $region15: #{tpu_custom_call.1} parent=0 // pred_check_branch
    %492 = sbr.rel (0) target = $region17
  $region16: #{tpu_custom_call.1} parent=0 // pred_region
    _
  $region17: #{tpu_custom_call.1} parent=0 // pred_fallthru
    _
  // Predicated region
  $region18: #{tpu_custom_call.1} parent=0 // pred_check
    _
  $region19: #{tpu_custom_call.1} parent=0 // pred_check_branch
    %494 = sbr.rel (0) target = $region21
  $region20: #{tpu_custom_call.1} parent=0 // pred_region
    _
  $region21: #{tpu_custom_call.1} parent=0 // pred_fallthru
    _

</llo_original>
